<compile_context>
chip_gen: v5e
topology: v5e:2x2
jax: 0.10.0
libtpu: 0.0.40
codegen_flags: <defaults>
</compile_context>

<pallas_src>
import jax
import jax.numpy as jnp
from jax.experimental import pallas as pl
from jax.experimental.pallas import tpu as pltpu


# Below this many bytes the copy is dominated by fixed launch overhead and the
# simple VMEM-staged path is best; above it, go straight HBM->HBM via DMA.
_DMA_MIN_BYTES = 1 << 20  # 1 MiB


# ----------------------------------------------------------------------------
# Small-theta path: whole-array VMEM block, plain vector copy.
# ----------------------------------------------------------------------------
def _hnull_vmem_kernel(theta_ref, out_ref):
    # "clone": materialize a fresh copy of theta into the output buffer.
    out_ref[...] = theta_ref[...]


def _hnull_vmem_copy(theta: jax.Array) -> jax.Array:
    w = theta.shape[0]
    itemsize = jnp.dtype(theta.dtype).itemsize
    # Lane-dense (rows, 128) slab; pad non-128-multiples (cheap under jit,
    # and this path is only taken for small theta anyway).
    padded = ((w + 127) // 128) * 128
    rows = padded // 128
    theta_slab = theta if padded == w else jnp.pad(theta, (0, padded - w))
    theta_slab = theta_slab.reshape(rows, 128)

    out_slab = pl.pallas_call(
        _hnull_vmem_kernel,
        out_shape=jax.ShapeDtypeStruct((rows, 128), theta.dtype),
        in_specs=[pl.BlockSpec(memory_space=pltpu.MemorySpace.VMEM)],
        out_specs=pl.BlockSpec(memory_space=pltpu.MemorySpace.VMEM),
        cost_estimate=pl.CostEstimate(
            flops=0,
            transcendentals=0,
            bytes_accessed=2 * padded * itemsize,
        ),
    )(theta_slab)
    return out_slab.reshape(padded)[:w]


# ----------------------------------------------------------------------------
# Large-theta path: HBM -> HBM copy on the DMA engine (no VMEM staging).
# ----------------------------------------------------------------------------
def _hnull_dma_kernel(theta_ref, out_ref, copy_sem):
    cp = pltpu.make_async_copy(theta_ref, out_ref, copy_sem)
    cp.start()
    cp.wait()


def _hnull_dma_copy(theta: jax.Array) -> jax.Array:
    w = theta.shape[0]
    itemsize = jnp.dtype(theta.dtype).itemsize
    # Present a (rows, 128) view when possible (free reshape, row-major
    # contiguous); otherwise copy the raw 1-D array -- the DMA engine does
    # not care about lane layout.
    if w % 128 == 0:
        view = theta.reshape(w // 128, 128)
    else:
        view = theta

    out = pl.pallas_call(
        _hnull_dma_kernel,
        out_shape=jax.ShapeDtypeStruct(view.shape, theta.dtype),
        in_specs=[pl.BlockSpec(memory_space=pl.ANY)],
        out_specs=pl.BlockSpec(memory_space=pl.ANY),
        scratch_shapes=[pltpu.SemaphoreType.DMA(())],
        cost_estimate=pl.CostEstimate(
            flops=0,
            transcendentals=0,
            bytes_accessed=2 * w * itemsize,
        ),
    )(view)
    return out.reshape(w)


# ----------------------------------------------------------------------------
# Public forward.
# ----------------------------------------------------------------------------
@jax.jit
def hnull_forward(theta: jax.Array, x: jax.Array) -> jax.Array:
    """Pallas equivalent of hNull.forward(x): returns a copy of theta.

    `x` is accepted for API parity but is not read (exactly like the
    PyTorch module).
    """
    del x  # unused, per the reference forward pass
    w = theta.shape[0]
    nbytes = w * jnp.dtype(theta.dtype).itemsize
    if nbytes > _DMA_MIN_BYTES:
        return _hnull_dma_copy(theta)
    return _hnull_vmem_copy(theta)


def make_hnull_params(key, theta_width: int, bound: float, dtype=jnp.float32):
    """Deterministic replacement for nn.init.uniform_(theta, -bound, bound)."""
    return jax.random.uniform(
        key, (theta_width,), dtype=dtype, minval=-bound, maxval=bound
    )


if __name__ == "__main__":
    # Module hyper-parameters (small, consistent with the constructor args).
    d = 4
    bound = 0.1
    theta_width = 32
    d_p_flag = False  # unused in forward

    key = jax.random.PRNGKey(0)
    k_theta, k_x, k_big = jax.random.split(key, 3)

    theta = make_hnull_params(k_theta, theta_width, bound)
    # Example input x; forward() ignores it (shape chosen as (batch, d)).
    x = jax.random.normal(k_x, (2, d), dtype=jnp.float32)

    out = jax.block_until_ready(hnull_forward(theta, x))

    # Sanity check: output must equal theta exactly (it is a copy).
    assert out.shape == (theta_width,)
    assert out.dtype == theta.dtype
    assert bool(jnp.all(out == theta))

    # Also exercise the large-theta HBM->HBM DMA path (2 MiB of f32).
    big_width = 512 * 1024
    theta_big = make_hnull_params(k_big, big_width, bound)
    out_big = jax.block_until_ready(hnull_forward(theta_big, x))
    assert out_big.shape == (big_width,)
    assert out_big.dtype == theta_big.dtype
    assert bool(jnp.all(out_big == theta_big))

    print("KERNEL_OK")
</pallas_src>

<mosaic_0001>
module attributes {stable_mosaic.version = 11 : i64} {
  func.func @_hnull_vmem_kernel(%arg0: memref<1x128xf32, #tpu.memory_space<vmem>>, %arg1: memref<1x128xf32, #tpu.memory_space<vmem>>) attributes {dimension_semantics = [], scalar_prefetch = 0 : i64, scratch_operands = 0 : i64, tpu.core_type = #tpu.core_type<tc>} {
    %c0 = arith.constant 0 : index
    %c0_0 = arith.constant 0 : index
    %0 = vector.load %arg0[%c0, %c0_0] : memref<1x128xf32, #tpu.memory_space<vmem>>, vector<1x128xf32>
    %c0_1 = arith.constant 0 : index
    %c0_2 = arith.constant 0 : index
    %1 = vector.load %arg1[%c0_1, %c0_2] : memref<1x128xf32, #tpu.memory_space<vmem>>, vector<1x128xf32>
    tpu.vector_store %arg1[%c0_1, %c0_2], %0 {strides = array<i32>} : memref<1x128xf32, #tpu.memory_space<vmem>>, vector<1x128xf32>,
    return
  }
}

</mosaic_0001>

<llo_original>
// kernel: hnull_forward.1
$region0: #{hnull_forward.1}
  #allocation0 [shape = 'u32[]', space=smem, size = 0x4, offset = 0x4, fixed_abs, tag = 'smem constant byte address 0x4 - core index']
  #allocation1 [shape = 'u32[72,128]{1,0:T(1,128)}', space=vmem, size = 0x9000, scoped, tag = 'internal scratch']
  %s0 = inlined_call_operand.vmem [shape: f32[1,128], index: 0, kind: input, shape index: {}]
  %s1 = inlined_call_operand.vmem [shape: f32[1,128], index: 1, kind: output, shape index: {}]
  %s2 = sld [smem:[#allocation0]]
  $region14: #{hnull_forward.1} parent=0
    _
  %s4 = ssub.s32 1, %s2
  %s5 = scalar_select 0, %s4, %s2
  // Predicated region
  $region2: #{hnull_forward.1} parent=0 // pred_check
    _
  $region3: #{hnull_forward.1} parent=0 // pred_check_branch
    %7 = sbr.rel (0) target = $region5
  $region4: #{hnull_forward.1} parent=0 // pred_region
    _
  $region5: #{hnull_forward.1} parent=0 // pred_fallthru
    _
  %v8 = vld [vmem:[%s0] sm:$0x1]
  %9 = vst [vmem:[%s1] sm:$0x1] %v8
  // Predicated region
  $region6: #{hnull_forward.1} parent=0 // pred_check
    _
  $region7: #{hnull_forward.1} parent=0 // pred_check_branch
    %11 = sbr.rel (0) target = $region9
  $region8: #{hnull_forward.1} parent=0 // pred_region
    _
  $region9: #{hnull_forward.1} parent=0 // pred_fallthru
    _
  // Predicated region
  $region10: #{hnull_forward.1} parent=0 // pred_check
    _
  $region11: #{hnull_forward.1} parent=0 // pred_check_branch
    %13 = sbr.rel (0) target = $region13
  $region12: #{hnull_forward.1} parent=0 // pred_region
    _
  $region13: #{hnull_forward.1} parent=0 // pred_fallthru
    _

</llo_original>
